<compile_context>
chip_gen: v5e
topology: v5e:2x2
jax: 0.10.0
libtpu: 0.0.40
codegen_flags: <defaults>
</compile_context>

<pallas_src>
import functools

import jax
import jax.numpy as jnp
import numpy as np
from jax.experimental import pallas as pl
from jax.experimental.pallas import tpu as pltpu

# ---- config (mirrors QuantumSSLConfig / pqc.config) -------------------------
PROJECTION_DIM = 128
LATENT_DIM = 64
NUM_QUBITS = 16          # pqc.config.num_qubits
NUM_PARAMETERS = 32      # pqc.config.num_parameters
RECONSTRUCTION_WEIGHT = 1.0
QUANTUM_WEIGHT = 0.5
BATCH = 8

# Packed output slab layout (lane-dense, one 128-wide output DMA per block).
OUT_LANES = 128
_RECON_OFF = 0
_LATENT_OFF = _RECON_OFF + NUM_QUBITS          # 16
_QV_OFF = _LATENT_OFF + LATENT_DIM             # 80
_USED_LANES = _QV_OFF + NUM_PARAMETERS         # 112; lanes 112..127 are exact 0
_NORM_EPS_SQ = 1e-24                           # == (1e-12 norm clamp) ** 2


def _round_up(n, m):
    return ((n + m - 1) // m) * m


def _qsa_kernel(x_ref,
                w1_ref, b1_ref,      # encoder Linear(num_qubits -> proj)
                w2_ref, b2_ref,      # encoder Linear(proj -> latent)
                w3_ref, b3_ref,      # decoder Linear(latent -> proj)
                wo_ref, bo_ref,      # fused output RHS (192,128): [dec2 | I64 | ver]
                slab_ref, loss_ref,
                *, batch):
    tb = x_ref.shape[0]
    x = x_ref[...]                                            # (tb, 16) f32

    # ---- encoder: Linear -> ReLU -> Linear (f32 MXU, f32 acc) --------------
    h1 = jnp.maximum(
        jnp.dot(x, w1_ref[...], preferred_element_type=jnp.float32)
        + b1_ref[...], 0.0)                                   # (tb, 128)
    latent = (jnp.dot(h1, w2_ref[...], preferred_element_type=jnp.float32)
              + b2_ref[...])                                  # (tb, 64)

    # ---- decoder layer 1 ----------------------------------------------------
    h2 = jnp.maximum(
        jnp.dot(latent, w3_ref[...], preferred_element_type=jnp.float32)
        + b3_ref[...], 0.0)                                   # (tb, 128)

    # ---- fused final matmul emits the whole output slab in lane order ------
    # lhs concat is at a vreg boundary (h2 is exactly 128 lanes) -> cheap.
    lhs = jnp.concatenate([h2, latent], axis=-1)              # (tb, 192)
    slab = (jnp.dot(lhs, wo_ref[...], preferred_element_type=jnp.float32)
            + bo_ref[...])                                    # (tb, 128)
    slab_ref[...] = slab

    # ---- per-block loss partial sums (masked for batch padding) ------------
    recon = slab[:, _RECON_OFF:_RECON_OFF + NUM_QUBITS]       # lane-0 slice: cheap
    row = (jax.lax.broadcasted_iota(jnp.int32, (tb, 1), 0)
           + pl.program_id(0) * tb)
    valid = (row < batch).astype(jnp.float32)                 # (tb, 1)

    diff = recon - x
    sse = jnp.sum(diff * diff, axis=-1, keepdims=True) * valid
    inv_xn = jax.lax.rsqrt(
        jnp.maximum(jnp.sum(x * x, axis=-1, keepdims=True), _NORM_EPS_SQ))
    inv_rn = jax.lax.rsqrt(
        jnp.maximum(jnp.sum(recon * recon, axis=-1, keepdims=True), _NORM_EPS_SQ))
    fid = jnp.abs(jnp.sum(x * recon, axis=-1, keepdims=True)
                  * inv_xn * inv_rn) * valid

    sse_sum = jnp.sum(sse)
    fid_sum = jnp.sum(fid)

    # Write the two block-level partial sums into [0,0] / [0,1] of an (8,128)
    # block (rest exact zeros); wrapper just sums the tiny loss output.
    sub = jax.lax.broadcasted_iota(jnp.int32, (8, OUT_LANES), 0)
    lane = jax.lax.broadcasted_iota(jnp.int32, (8, OUT_LANES), 1)
    loss_ref[...] = jnp.where(
        (sub == 0) & (lane == 0), sse_sum,
        jnp.where((sub == 0) & (lane == 1), fid_sum, 0.0))


def prepare_params(params):
    """One-time glue (NOT in the hot path).

    Transposes torch-style (out,in) weights to (in,out) f32, reshapes biases
    to (1,out) f32, and builds the fused output RHS:
      rows   0..127 -> w_dec2 into recon lanes 0..15
      rows 128..191 -> I64 into latent lanes 16..79, w_ver into qv lanes 80..111
      lanes 112..127 are zero columns (=> exact-zero pad lanes in the slab).
    """
    def wT(name):
        return jnp.asarray(params[name + "_w"], jnp.float32).T

    def b(name):
        return jnp.asarray(params[name + "_b"], jnp.float32).reshape(1, -1)

    w_out = jnp.zeros((PROJECTION_DIM + LATENT_DIM, OUT_LANES), jnp.float32)
    w_out = w_out.at[:PROJECTION_DIM,
                     _RECON_OFF:_RECON_OFF + NUM_QUBITS].set(wT("dec2"))
    w_out = w_out.at[PROJECTION_DIM:,
                     _LATENT_OFF:_LATENT_OFF + LATENT_DIM].set(
                         jnp.eye(LATENT_DIM, dtype=jnp.float32))
    w_out = w_out.at[PROJECTION_DIM:,
                     _QV_OFF:_QV_OFF + NUM_PARAMETERS].set(wT("ver"))

    b_out = jnp.zeros((1, OUT_LANES), jnp.float32)
    b_out = b_out.at[:, _RECON_OFF:_RECON_OFF + NUM_QUBITS].set(b("dec2"))
    b_out = b_out.at[:, _QV_OFF:_QV_OFF + NUM_PARAMETERS].set(b("ver"))

    return (
        wT("enc1"), b("enc1"),     # (16,128), (1,128)
        wT("enc2"), b("enc2"),     # (128,64), (1,64)
        wT("dec1"), b("dec1"),     # (64,128), (1,128)
        w_out, b_out,              # (192,128), (1,128)
    )


@functools.partial(jax.jit, static_argnames=("block_b",))
def quantum_state_autoencoder_forward(x, kparams, block_b=1024):
    """Full forward pass.

    Returns:
      reconstructed (B, NUM_QUBITS), latent (B, LATENT_DIM),
      quantum_verification (B, NUM_PARAMETERS),
      losses (3,) = [reconstruction_loss, quantum_loss, total_loss]
    Note: recon/latent/qv are lane-slices of the packed (B,128) slab, i.e.
    small copies at the XLA level (accepted; the slab itself is one DMA).
    """
    B = x.shape[0]
    Bp8 = _round_up(max(B, 1), 8)
    tb = min(block_b, Bp8)
    if Bp8 > 8:
        # Ensure >= 2 grid steps so both v7x TensorCores get work.
        tb = min(tb, _round_up(pl.cdiv(Bp8, 2), 8))
    Bp = _round_up(Bp8, tb)
    G = Bp // tb
    xp = x if Bp == B else jnp.pad(x, ((0, Bp - B), (0, 0)))

    weight_specs = [pl.BlockSpec(p.shape, lambda i: (0, 0)) for p in kparams]

    slab, loss_part = pl.pallas_call(
        functools.partial(_qsa_kernel, batch=B),
        out_shape=(jax.ShapeDtypeStruct((Bp, OUT_LANES), jnp.float32),
                   jax.ShapeDtypeStruct((G * 8, OUT_LANES), jnp.float32)),
        grid_spec=pltpu.PrefetchScalarGridSpec(
            num_scalar_prefetch=0,
            grid=(G,),
            in_specs=[pl.BlockSpec((tb, NUM_QUBITS), lambda i: (i, 0))]
                     + weight_specs,
            out_specs=(pl.BlockSpec((tb, OUT_LANES), lambda i: (i, 0)),
                       pl.BlockSpec((8, OUT_LANES), lambda i: (i, 0))),
        ),
        compiler_params=pltpu.CompilerParams(
            dimension_semantics=("parallel",)),
    )(xp, *kparams)

    # Finish the (tiny) loss reductions from in-kernel per-block partial sums.
    loss_sums = jnp.sum(loss_part, axis=0)                    # (128,)
    recon_loss = loss_sums[0] / (B * NUM_QUBITS)              # mse_loss (mean)
    quantum_loss = -loss_sums[1] / B
    total_loss = (RECONSTRUCTION_WEIGHT * recon_loss
                  + QUANTUM_WEIGHT * quantum_loss)
    losses = jnp.stack([recon_loss, quantum_loss, total_loss])

    slab = slab[:B]
    recon = slab[:, _RECON_OFF:_RECON_OFF + NUM_QUBITS]
    latent = slab[:, _LATENT_OFF:_LATENT_OFF + LATENT_DIM]
    qv = slab[:, _QV_OFF:_QV_OFF + NUM_PARAMETERS]
    return recon, latent, qv, losses


def init_params(key):
    """Deterministic torch-Linear-style init: U(-1/sqrt(fan_in), 1/sqrt(fan_in))."""
    layer_shapes = {
        "enc1": (PROJECTION_DIM, NUM_QUBITS),
        "enc2": (LATENT_DIM, PROJECTION_DIM),
        "dec1": (PROJECTION_DIM, LATENT_DIM),
        "dec2": (NUM_QUBITS, PROJECTION_DIM),
        "ver": (NUM_PARAMETERS, LATENT_DIM),
    }
    params = {}
    for name, (out_f, in_f) in layer_shapes.items():
        key, kw, kb = jax.random.split(key, 3)
        bound = 1.0 / jnp.sqrt(in_f)
        params[name + "_w"] = jax.random.uniform(
            kw, (out_f, in_f), jnp.float32, -bound, bound)
        params[name + "_b"] = jax.random.uniform(
            kb, (out_f,), jnp.float32, -bound, bound)
    return params


def ref_forward_np(x, params):
    """float64 numpy reference with torch nn.Linear semantics (true-f32 model
    parity check; tolerance covers the MXU's multi-pass f32 matmul error)."""
    x = np.asarray(x, np.float64)

    def lin(a, wname):
        w = np.asarray(params[wname + "_w"], np.float64)
        b = np.asarray(params[wname + "_b"], np.float64)
        return a @ w.T + b

    h1 = np.maximum(lin(x, "enc1"), 0.0)
    lat = lin(h1, "enc2")
    h2 = np.maximum(lin(lat, "dec1"), 0.0)
    rec = lin(h2, "dec2")
    q = lin(lat, "ver")

    rloss = np.mean((rec - x) ** 2)
    xn = np.sqrt(np.maximum(np.sum(x * x, -1), _NORM_EPS_SQ))
    rn = np.sqrt(np.maximum(np.sum(rec * rec, -1), _NORM_EPS_SQ))
    fid = np.abs(np.sum(x * rec, -1) / (xn * rn))
    qloss = -np.mean(fid)
    tloss = RECONSTRUCTION_WEIGHT * rloss + QUANTUM_WEIGHT * qloss
    return rec, lat, q, np.array([rloss, qloss, tloss])


if __name__ == "__main__":
    key = jax.random.PRNGKey(0)
    key, kx = jax.random.split(key)
    x = jax.random.normal(kx, (BATCH, NUM_QUBITS), jnp.float32)
    params = init_params(key)
    kparams = prepare_params(params)     # one-time, outside the hot path

    recon, latent, qv, losses = quantum_state_autoencoder_forward(x, kparams)
    jax.block_until_ready((recon, latent, qv, losses))

    assert recon.shape == (BATCH, NUM_QUBITS)
    assert latent.shape == (BATCH, LATENT_DIM)
    assert qv.shape == (BATCH, NUM_PARAMETERS)
    assert losses.shape == (3,)
    assert bool(jnp.all(jnp.isfinite(losses)))

    rec_r, lat_r, qv_r, losses_r = ref_forward_np(np.asarray(x), params)
    TOL = dict(atol=5e-3, rtol=5e-3)
    assert np.allclose(np.asarray(recon), rec_r, **TOL)
    assert np.allclose(np.asarray(latent), lat_r, **TOL)
    assert np.allclose(np.asarray(qv), qv_r, **TOL)
    assert np.allclose(np.asarray(losses), losses_r, **TOL)

    # Second check: non-multiple-of-8 batch -> multi-step parallel grid,
    # padded-row masking of the in-kernel loss reduction.
    key, kx2 = jax.random.split(key)
    x2 = jax.random.normal(kx2, (37, NUM_QUBITS), jnp.float32)
    recon2, latent2, qv2, losses2 = quantum_state_autoencoder_forward(x2, kparams)
    jax.block_until_ready((recon2, latent2, qv2, losses2))
    rec2_r, lat2_r, qv2_r, losses2_r = ref_forward_np(np.asarray(x2), params)
    assert np.allclose(np.asarray(recon2), rec2_r, **TOL)
    assert np.allclose(np.asarray(latent2), lat2_r, **TOL)
    assert np.allclose(np.asarray(qv2), qv2_r, **TOL)
    assert np.allclose(np.asarray(losses2), losses2_r, **TOL)

    print("KERNEL_OK")
</pallas_src>

<mosaic_0001>
module attributes {stable_mosaic.version = 11 : i64} {
  func.func @_qsa_kernel(%arg0: i32, %arg1: memref<8x16xf32, #tpu.memory_space<vmem>>, %arg2: memref<16x128xf32, #tpu.memory_space<vmem>>, %arg3: memref<1x128xf32, #tpu.memory_space<vmem>>, %arg4: memref<128x64xf32, #tpu.memory_space<vmem>>, %arg5: memref<1x64xf32, #tpu.memory_space<vmem>>, %arg6: memref<64x128xf32, #tpu.memory_space<vmem>>, %arg7: memref<1x128xf32, #tpu.memory_space<vmem>>, %arg8: memref<192x128xf32, #tpu.memory_space<vmem>>, %arg9: memref<1x128xf32, #tpu.memory_space<vmem>>, %arg10: memref<8x128xf32, #tpu.memory_space<vmem>>, %arg11: memref<8x128xf32, #tpu.memory_space<vmem>>) attributes {dimension_semantics = [#tpu.dimension_semantics<parallel>], iteration_bounds = array<i64: 1>, scalar_prefetch = 0 : i64, scratch_operands = 0 : i64, tpu.core_type = #tpu.core_type<tc>, window_params = [{transform_indices = @transform_0, window_bounds = array<i64: 8, 16>}, {pipeline_mode = #tpu.pipeline_mode<synchronous>, transform_indices = @transform_1, window_bounds = array<i64: 16, 128>}, {pipeline_mode = #tpu.pipeline_mode<synchronous>, transform_indices = @transform_2, window_bounds = array<i64: 1, 128>}, {pipeline_mode = #tpu.pipeline_mode<synchronous>, transform_indices = @transform_3, window_bounds = array<i64: 128, 64>}, {pipeline_mode = #tpu.pipeline_mode<synchronous>, transform_indices = @transform_4, window_bounds = array<i64: 1, 64>}, {pipeline_mode = #tpu.pipeline_mode<synchronous>, transform_indices = @transform_5, window_bounds = array<i64: 64, 128>}, {pipeline_mode = #tpu.pipeline_mode<synchronous>, transform_indices = @transform_6, window_bounds = array<i64: 1, 128>}, {pipeline_mode = #tpu.pipeline_mode<synchronous>, transform_indices = @transform_7, window_bounds = array<i64: 192, 128>}, {pipeline_mode = #tpu.pipeline_mode<synchronous>, transform_indices = @transform_8, window_bounds = array<i64: 1, 128>}, {transform_indices = @transform_9, window_bounds = array<i64: 8, 128>}, {transform_indices = @transform_10, window_bounds = array<i64: 8, 128>}]} {
    %c0 = arith.constant 0 : index
    %c0_0 = arith.constant 0 : index
    %0 = vector.load %arg1[%c0, %c0_0] : memref<8x16xf32, #tpu.memory_space<vmem>>, vector<8x16xf32>
    %c0_1 = arith.constant 0 : index
    %c0_2 = arith.constant 0 : index
    %1 = vector.load %arg2[%c0_1, %c0_2] : memref<16x128xf32, #tpu.memory_space<vmem>>, vector<16x128xf32>
    %cst = arith.constant dense<0.000000e+00> : vector<8x128xf32>
    %2 = tpu.matmul %0, %1, %cst {dimension_numbers = #tpu.dot_dimension_numbers<[1], [0], [0], [1], [0, 0, 1, 1], [], []>} : vector<8x16xf32>, vector<16x128xf32>, vector<8x128xf32> -> vector<8x128xf32>
    %c0_3 = arith.constant 0 : index
    %c0_4 = arith.constant 0 : index
    %3 = vector.load %arg3[%c0_3, %c0_4] : memref<1x128xf32, #tpu.memory_space<vmem>>, vector<1x128xf32>
    %4 = vector.broadcast %3 : vector<1x128xf32> to vector<8x128xf32>
    %5 = arith.addf %2, %4 : vector<8x128xf32>
    %cst_5 = arith.constant 0.000000e+00 : f32
    %6 = vector.broadcast %cst_5 : f32 to vector<8x128xf32>
    %7 = arith.maximumf %5, %6 : vector<8x128xf32>
    %c0_6 = arith.constant 0 : index
    %c0_7 = arith.constant 0 : index
    %8 = vector.load %arg4[%c0_6, %c0_7] : memref<128x64xf32, #tpu.memory_space<vmem>>, vector<128x64xf32>
    %cst_8 = arith.constant dense<0.000000e+00> : vector<8x64xf32>
    %9 = tpu.matmul %7, %8, %cst_8 {dimension_numbers = #tpu.dot_dimension_numbers<[1], [0], [0], [1], [0, 0, 1, 1], [], []>} : vector<8x128xf32>, vector<128x64xf32>, vector<8x64xf32> -> vector<8x64xf32>
    %c0_9 = arith.constant 0 : index
    %c0_10 = arith.constant 0 : index
    %10 = vector.load %arg5[%c0_9, %c0_10] : memref<1x64xf32, #tpu.memory_space<vmem>>, vector<1x64xf32>
    %11 = vector.broadcast %10 : vector<1x64xf32> to vector<8x64xf32>
    %12 = arith.addf %9, %11 : vector<8x64xf32>
    %c0_11 = arith.constant 0 : index
    %c0_12 = arith.constant 0 : index
    %13 = vector.load %arg6[%c0_11, %c0_12] : memref<64x128xf32, #tpu.memory_space<vmem>>, vector<64x128xf32>
    %cst_13 = arith.constant dense<0.000000e+00> : vector<8x128xf32>
    %14 = tpu.matmul %12, %13, %cst_13 {dimension_numbers = #tpu.dot_dimension_numbers<[1], [0], [0], [1], [0, 0, 1, 1], [], []>} : vector<8x64xf32>, vector<64x128xf32>, vector<8x128xf32> -> vector<8x128xf32>
    %c0_14 = arith.constant 0 : index
    %c0_15 = arith.constant 0 : index
    %15 = vector.load %arg7[%c0_14, %c0_15] : memref<1x128xf32, #tpu.memory_space<vmem>>, vector<1x128xf32>
    %16 = vector.broadcast %15 : vector<1x128xf32> to vector<8x128xf32>
    %17 = arith.addf %14, %16 : vector<8x128xf32>
    %cst_16 = arith.constant 0.000000e+00 : f32
    %18 = vector.broadcast %cst_16 : f32 to vector<8x128xf32>
    %19 = arith.maximumf %17, %18 : vector<8x128xf32>
    %20 = tpu.concatenate %19, %12 in 1 : vector<8x128xf32>, vector<8x64xf32> -> vector<8x192xf32>
    %c0_17 = arith.constant 0 : index
    %c0_18 = arith.constant 0 : index
    %21 = vector.load %arg8[%c0_17, %c0_18] : memref<192x128xf32, #tpu.memory_space<vmem>>, vector<192x128xf32>
    %cst_19 = arith.constant dense<0.000000e+00> : vector<8x128xf32>
    %22 = tpu.matmul %20, %21, %cst_19 {dimension_numbers = #tpu.dot_dimension_numbers<[1], [0], [0], [1], [0, 0, 1, 1], [], []>} : vector<8x192xf32>, vector<192x128xf32>, vector<8x128xf32> -> vector<8x128xf32>
    %c0_20 = arith.constant 0 : index
    %c0_21 = arith.constant 0 : index
    %23 = vector.load %arg9[%c0_20, %c0_21] : memref<1x128xf32, #tpu.memory_space<vmem>>, vector<1x128xf32>
    %24 = vector.broadcast %23 : vector<1x128xf32> to vector<8x128xf32>
    %25 = arith.addf %22, %24 : vector<8x128xf32>
    %c0_22 = arith.constant 0 : index
    %c0_23 = arith.constant 0 : index
    %26 = vector.load %arg10[%c0_22, %c0_23] : memref<8x128xf32, #tpu.memory_space<vmem>>, vector<8x128xf32>
    tpu.vector_store %arg10[%c0_22, %c0_23], %25 {strides = array<i32>} : memref<8x128xf32, #tpu.memory_space<vmem>>, vector<8x128xf32>,
    %27 = vector.extract_strided_slice %25 {offsets = [0, 0], sizes = [8, 16], strides = [1, 1]} : vector<8x128xf32> to vector<8x16xf32>
    %28 = tpu.iota {dimensions = array<i32: 0>} : vector<8x1xi32>
    %c8_i32 = arith.constant 8 : i32
    %29 = arith.muli %arg0, %c8_i32 : i32
    %30 = vector.broadcast %29 : i32 to vector<8x1xi32>
    %31 = arith.addi %28, %30 : vector<8x1xi32>
    %c8_i32_24 = arith.constant 8 : i32
    %32 = vector.broadcast %c8_i32_24 : i32 to vector<8x1xi32>
    %33 = arith.cmpi slt, %31, %32 : vector<8x1xi32>
    %34 = arith.extui %33 : vector<8x1xi1> to vector<8x1xi32>
    %35 = arith.sitofp %34 : vector<8x1xi32> to vector<8x1xf32>
    %36 = arith.subf %27, %0 : vector<8x16xf32>
    %37 = arith.mulf %36, %36 : vector<8x16xf32>
    %cst_25 = arith.constant dense<0.000000e+00> : vector<8xf32>
    %38 = vector.multi_reduction <add>, %37, %cst_25 [1] : vector<8x16xf32> to vector<8xf32>
    %39 = vector.shape_cast %38 : vector<8xf32> to vector<8x1xf32>
    %40 = arith.mulf %39, %35 : vector<8x1xf32>
    %41 = arith.mulf %0, %0 : vector<8x16xf32>
    %cst_26 = arith.constant dense<0.000000e+00> : vector<8xf32>
    %42 = vector.multi_reduction <add>, %41, %cst_26 [1] : vector<8x16xf32> to vector<8xf32>
    %43 = vector.shape_cast %42 : vector<8xf32> to vector<8x1xf32>
    %cst_27 = arith.constant 1.000000e-24 : f32
    %44 = vector.broadcast %cst_27 : f32 to vector<8x1xf32>
    %45 = arith.maximumf %43, %44 : vector<8x1xf32>
    %46 = math.rsqrt %45 : vector<8x1xf32>
    %47 = arith.mulf %27, %27 : vector<8x16xf32>
    %cst_28 = arith.constant dense<0.000000e+00> : vector<8xf32>
    %48 = vector.multi_reduction <add>, %47, %cst_28 [1] : vector<8x16xf32> to vector<8xf32>
    %49 = vector.shape_cast %48 : vector<8xf32> to vector<8x1xf32>
    %cst_29 = arith.constant 1.000000e-24 : f32
    %50 = vector.broadcast %cst_29 : f32 to vector<8x1xf32>
    %51 = arith.maximumf %49, %50 : vector<8x1xf32>
    %52 = math.rsqrt %51 : vector<8x1xf32>
    %53 = arith.mulf %0, %27 : vector<8x16xf32>
    %cst_30 = arith.constant dense<0.000000e+00> : vector<8xf32>
    %54 = vector.multi_reduction <add>, %53, %cst_30 [1] : vector<8x16xf32> to vector<8xf32>
    %55 = vector.shape_cast %54 : vector<8xf32> to vector<8x1xf32>
    %56 = arith.mulf %55, %46 : vector<8x1xf32>
    %57 = arith.mulf %56, %52 : vector<8x1xf32>
    %58 = math.absf %57 : vector<8x1xf32>
    %59 = arith.mulf %58, %35 : vector<8x1xf32>
    %60 = vector.shape_cast %40 : vector<8x1xf32> to vector<1x8x1xf32>
    %cst_31 = arith.constant dense<0.000000e+00> : vector<1xf32>
    %61 = vector.multi_reduction <add>, %60, %cst_31 [1, 2] : vector<1x8x1xf32> to vector<1xf32>
    %62 = vector.shape_cast %61 : vector<1xf32> to vector<1x1x1xf32>
    %63 = vector.extract %62[0, 0, 0] : f32 from vector<1x1x1xf32>
    %64 = vector.shape_cast %59 : vector<8x1xf32> to vector<1x8x1xf32>
    %cst_32 = arith.constant dense<0.000000e+00> : vector<1xf32>
    %65 = vector.multi_reduction <add>, %64, %cst_32 [1, 2] : vector<1x8x1xf32> to vector<1xf32>
    %66 = vector.shape_cast %65 : vector<1xf32> to vector<1x1x1xf32>
    %67 = vector.extract %66[0, 0, 0] : f32 from vector<1x1x1xf32>
    %68 = tpu.iota {dimensions = array<i32: 0>} : vector<8x128xi32>
    %69 = tpu.iota {dimensions = array<i32: 1>} : vector<8x128xi32>
    %c0_i32 = arith.constant 0 : i32
    %70 = vector.broadcast %c0_i32 : i32 to vector<8x128xi32>
    %71 = arith.cmpi eq, %68, %70 : vector<8x128xi32>
    %c0_i32_33 = arith.constant 0 : i32
    %72 = vector.broadcast %c0_i32_33 : i32 to vector<8x128xi32>
    %73 = arith.cmpi eq, %69, %72 : vector<8x128xi32>
    %74 = arith.andi %71, %73 : vector<8x128xi1>
    %c0_i32_34 = arith.constant 0 : i32
    %75 = vector.broadcast %c0_i32_34 : i32 to vector<8x128xi32>
    %76 = arith.cmpi eq, %68, %75 : vector<8x128xi32>
    %c1_i32 = arith.constant 1 : i32
    %77 = vector.broadcast %c1_i32 : i32 to vector<8x128xi32>
    %78 = arith.cmpi eq, %69, %77 : vector<8x128xi32>
    %79 = arith.andi %76, %78 : vector<8x128xi1>
    %cst_35 = arith.constant 0.000000e+00 : f32
    %80 = vector.broadcast %67 : f32 to vector<8x128xf32>
    %81 = vector.broadcast %cst_35 : f32 to vector<8x128xf32>
    %82 = arith.select %79, %80, %81 : vector<8x128xi1>, vector<8x128xf32>
    %83 = vector.broadcast %63 : f32 to vector<8x128xf32>
    %84 = arith.select %74, %83, %82 : vector<8x128xi1>, vector<8x128xf32>
    %c0_36 = arith.constant 0 : index
    %c0_37 = arith.constant 0 : index
    %85 = vector.load %arg11[%c0_36, %c0_37] : memref<8x128xf32, #tpu.memory_space<vmem>>, vector<8x128xf32>
    tpu.vector_store %arg11[%c0_36, %c0_37], %84 {strides = array<i32>} : memref<8x128xf32, #tpu.memory_space<vmem>>, vector<8x128xf32>,
    return
  }
  func.func @transform_0(%arg0: i32) -> (i32, i32) {
    %c0_i32 = arith.constant 0 : i32
    %c0_i32_0 = arith.constant 0 : i32
    return %arg0, %c0_i32 : i32, i32
  }
  func.func @transform_1(%arg0: i32) -> (i32, i32) {
    %c0_i32 = arith.constant 0 : i32
    %c0_i32_0 = arith.constant 0 : i32
    %c0_i32_1 = arith.constant 0 : i32
    return %c0_i32, %c0_i32_0 : i32, i32
  }
  func.func @transform_2(%arg0: i32) -> (i32, i32) {
    %c0_i32 = arith.constant 0 : i32
    %c0_i32_0 = arith.constant 0 : i32
    %c0_i32_1 = arith.constant 0 : i32
    return %c0_i32, %c0_i32_0 : i32, i32
  }
  func.func @transform_3(%arg0: i32) -> (i32, i32) {
    %c0_i32 = arith.constant 0 : i32
    %c0_i32_0 = arith.constant 0 : i32
    %c0_i32_1 = arith.constant 0 : i32
    return %c0_i32, %c0_i32_0 : i32, i32
  }
  func.func @transform_4(%arg0: i32) -> (i32, i32) {
    %c0_i32 = arith.constant 0 : i32
    %c0_i32_0 = arith.constant 0 : i32
    %c0_i32_1 = arith.constant 0 : i32
    return %c0_i32, %c0_i32_0 : i32, i32
  }
  func.func @transform_5(%arg0: i32) -> (i32, i32) {
    %c0_i32 = arith.constant 0 : i32
    %c0_i32_0 = arith.constant 0 : i32
    %c0_i32_1 = arith.constant 0 : i32
    return %c0_i32, %c0_i32_0 : i32, i32
  }
  func.func @transform_6(%arg0: i32) -> (i32, i32) {
    %c0_i32 = arith.constant 0 : i32
    %c0_i32_0 = arith.constant 0 : i32
    %c0_i32_1 = arith.constant 0 : i32
    return %c0_i32, %c0_i32_0 : i32, i32
  }
  func.func @transform_7(%arg0: i32) -> (i32, i32) {
    %c0_i32 = arith.constant 0 : i32
    %c0_i32_0 = arith.constant 0 : i32
    %c0_i32_1 = arith.constant 0 : i32
    return %c0_i32, %c0_i32_0 : i32, i32
  }
  func.func @transform_8(%arg0: i32) -> (i32, i32) {
    %c0_i32 = arith.constant 0 : i32
    %c0_i32_0 = arith.constant 0 : i32
    %c0_i32_1 = arith.constant 0 : i32
    return %c0_i32, %c0_i32_0 : i32, i32
  }
  func.func @transform_9(%arg0: i32) -> (i32, i32) {
    %c0_i32 = arith.constant 0 : i32
    %c0_i32_0 = arith.constant 0 : i32
    return %arg0, %c0_i32 : i32, i32
  }
  func.func @transform_10(%arg0: i32) -> (i32, i32) {
    %c0_i32 = arith.constant 0 : i32
    %c0_i32_0 = arith.constant 0 : i32
    return %arg0, %c0_i32 : i32, i32
  }
}

</mosaic_0001>

<llo_original>
// kernel: quantum_state_autoencoder_forward.1
$region0: #{quantum_state_autoencoder_forward.1}
  #allocation0 [shape = 'u32[]', space=smem, size = 0x4, offset = 0x4, fixed_abs, tag = 'smem constant byte address 0x4 - core index']
  #allocation1 [shape = 'u32[72,128]{1,0:T(1,128)}', space=vmem, size = 0x9000, scoped, tag = 'internal scratch']
  %s0 = inlined_call_operand.hbm [shape: f32[8,16], index: 0, kind: input, shape index: {}]
  %s1 = inlined_call_operand.hbm [shape: f32[16,128], index: 1, kind: input, shape index: {}]
  %s2 = inlined_call_operand.vmem [shape: f32[1,128], index: 2, kind: input, shape index: {}]
  %s3 = inlined_call_operand.vmem [shape: f32[128,64], index: 3, kind: input, shape index: {}]
  %s4 = inlined_call_operand.vmem [shape: f32[1,64], index: 4, kind: input, shape index: {}]
  %s5 = inlined_call_operand.hbm [shape: f32[64,128], index: 5, kind: input, shape index: {}]
  %s6 = inlined_call_operand.vmem [shape: f32[1,128], index: 6, kind: input, shape index: {}]
  %s7 = inlined_call_operand.vmem [shape: f32[192,128], index: 7, kind: input, shape index: {}]
  %s8 = inlined_call_operand.vmem [shape: f32[1,128], index: 8, kind: input, shape index: {}]
  %s9 = inlined_call_operand.vmem [shape: f32[8,128], index: 9, kind: output, shape index: {0}]
  %s10 = inlined_call_operand.vmem [shape: f32[8,128], index: 10, kind: output, shape index: {1}]
  %11 = xla_tuple %s9, %s10
  %s12 = sld [smem:[#allocation0]]
  $region66: #{quantum_state_autoencoder_forward.1} parent=0
    _
  %s14 = ssub.s32 1, %s12
  %s15 = scalar_select 0, %s14, %s12
  $region1: #{quantum_state_autoencoder_forward.1} parent=0
    #allocation2 [shape = 'u8[4096]{0}', space=vmem, size = 0x1000, scoped, tag = 'input window, operand 0, single buffered']
    #allocation3 [shape = 's32[1]{0}', space=sflag, size = 0x4, scoped, tag = 'scoped memory for quantum_state_autoencoder_forward.1']
    #allocation4 [shape = 'u8[8192]{0}', space=vmem, size = 0x2000, scoped, tag = 'input window, operand 1, single buffered']
    #allocation5 [shape = 's32[1]{0}', space=sflag, size = 0x4, scoped, tag = 'scoped memory for quantum_state_autoencoder_forward.1']
    #allocation6 [shape = 'u8[32768]{0}', space=vmem, size = 0x8000, scoped, tag = 'input window, operand 5, single buffered']
    %16 = vsyncpa [#allocation3], 0
    %17 = vsyncpa [#allocation5], 0
    // Predicated region
    $region2: #{quantum_state_autoencoder_forward.1} parent=1 // pred_check
      _
    $region3: #{quantum_state_autoencoder_forward.1} parent=1 // pred_check_branch
      %19 = sbr.rel (0) target = $region5
    $region4: #{quantum_state_autoencoder_forward.1} parent=1 // pred_region
      %21 = vsyncadd [#allocation3], 0
      %s23 = sshll.u32 %s0, 4
      %s24 = int_to_ptr.hbm [resolvable:$true] %s23
      %s25 = sshll.u32 [#allocation2], 4
      %s26 = int_to_ptr.vmem [resolvable:$true] %s25
      %28 = dma.hbm_to_vmem [thread:$0]  %s24, 128, %s26, [#allocation3]
    $region5: #{quantum_state_autoencoder_forward.1} parent=1 // pred_fallthru
      _
    // Predicated region
    $region6: #{quantum_state_autoencoder_forward.1} parent=1 // pred_check
      _
    $region7: #{quantum_state_autoencoder_forward.1} parent=1 // pred_check_branch
      %30 = sbr.rel (0) target = $region9
    $region8: #{quantum_state_autoencoder_forward.1} parent=1 // pred_region
      %32 = vsyncadd [#allocation5], 0
      %s33 = sshll.u32 %s1, 4
      %s34 = int_to_ptr.hbm [resolvable:$true] %s33
      %s35 = sshll.u32 [#allocation4], 4
      %s36 = int_to_ptr.vmem [resolvable:$true] %s35
      %41 = dma.hbm_to_vmem [thread:$0]  %s34, 256, %s36, [#allocation5], 128, 128, 8
    $region9: #{quantum_state_autoencoder_forward.1} parent=1 // pred_fallthru
      _
    // Predicated region
    $region10: #{quantum_state_autoencoder_forward.1} parent=1 // pred_check
      _
    $region11: #{quantum_state_autoencoder_forward.1} parent=1 // pred_check_branch
      %43 = sbr.rel (0) target = $region13
    $region12: #{quantum_state_autoencoder_forward.1} parent=1 // pred_region
      _
    $region13: #{quantum_state_autoencoder_forward.1} parent=1 // pred_fallthru
      _
    // Predicated region
    $region14: #{quantum_state_autoencoder_forward.1} parent=1 // pred_check
      _
    $region15: #{quantum_state_autoencoder_forward.1} parent=1 // pred_check_branch
      %45 = sbr.rel (0) target = $region17
    $region16: #{quantum_state_autoencoder_forward.1} parent=1 // pred_region
      _
    $region17: #{quantum_state_autoencoder_forward.1} parent=1 // pred_fallthru
      _
    // Predicated region
    $region18: #{quantum_state_autoencoder_forward.1} parent=1 // pred_check
      _
    $region19: #{quantum_state_autoencoder_forward.1} parent=1 // pred_check_branch
      %47 = sbr.rel (0) target = $region21
    $region20: #{quantum_state_autoencoder_forward.1} parent=1 // pred_region
      _
    $region21: #{quantum_state_autoencoder_forward.1} parent=1 // pred_fallthru
      _
    // Predicated region
    $region22: #{quantum_state_autoencoder_forward.1} parent=1 // pred_check
      _
    $region23: #{quantum_state_autoencoder_forward.1} parent=1 // pred_check_branch
      %49 = sbr.rel (0) target = $region25
    $region24: #{quantum_state_autoencoder_forward.1} parent=1 // pred_region
      %51 = vsyncadd [#allocation5], 0
      %s52 = sshll.u32 %s5, 4
      %s53 = int_to_ptr.hbm [resolvable:$true] %s52
      %s54 = sshll.u32 [#allocation6], 4
      %s55 = int_to_ptr.vmem [resolvable:$true] %s54
      %60 = dma.hbm_to_vmem [thread:$0]  %s53, 1024, %s55, [#allocation5], 128, 128, 8
    $region25: #{quantum_state_autoencoder_forward.1} parent=1 // pred_fallthru
      _
    // Predicated region
    $region26: #{quantum_state_autoencoder_forward.1} parent=1 // pred_check
      _
    $region27: #{quantum_state_autoencoder_forward.1} parent=1 // pred_check_branch
      %62 = sbr.rel (0) target = $region29
    $region28: #{quantum_state_autoencoder_forward.1} parent=1 // pred_region
      _
    $region29: #{quantum_state_autoencoder_forward.1} parent=1 // pred_fallthru
      _
    // Predicated region
    $region30: #{quantum_state_autoencoder_forward.1} parent=1 // pred_check
      _
    $region31: #{quantum_state_autoencoder_forward.1} parent=1 // pred_check_branch
      %64 = sbr.rel (0) target = $region33
    $region32: #{quantum_state_autoencoder_forward.1} parent=1 // pred_region
      _
    $region33: #{quantum_state_autoencoder_forward.1} parent=1 // pred_fallthru
      _
    // Predicated region
    $region34: #{quantum_state_autoencoder_forward.1} parent=1 // pred_check
      _
    $region35: #{quantum_state_autoencoder_forward.1} parent=1 // pred_check_branch
      %66 = sbr.rel (0) target = $region37
    $region36: #{quantum_state_autoencoder_forward.1} parent=1 // pred_region
      _
    $region37: #{quantum_state_autoencoder_forward.1} parent=1 // pred_fallthru
      _
    // Predicated region
    $region38: #{quantum_state_autoencoder_forward.1} parent=1 // pred_check
      _
    $region39: #{quantum_state_autoencoder_forward.1} parent=1 // pred_check_branch
      %68 = sbr.rel (0) target = $region41
    $region40: #{quantum_state_autoencoder_forward.1} parent=1 // pred_region
      %70 = dma.done [#allocation3], 128
    $region41: #{quantum_state_autoencoder_forward.1} parent=1 // pred_fallthru
      _
    // Predicated region
    $region42: #{quantum_state_autoencoder_forward.1} parent=1 // pred_check
      _
    $region43: #{quantum_state_autoencoder_forward.1} parent=1 // pred_check_branch
      %72 = sbr.rel (0) target = $region45
    $region44: #{quantum_state_autoencoder_forward.1} parent=1 // pred_region
      %74 = dma.done [#allocation5], 256
    $region45: #{quantum_state_autoencoder_forward.1} parent=1 // pred_fallthru
      _
    // Predicated region
    $region46: #{quantum_state_autoencoder_forward.1} parent=1 // pred_check
      _
    $region47: #{quantum_state_autoencoder_forward.1} parent=1 // pred_check_branch
      %76 = sbr.rel (0) target = $region49
    $region48: #{quantum_state_autoencoder_forward.1} parent=1 // pred_region
      %78 = dma.done [#allocation5], 1024
    $region49: #{quantum_state_autoencoder_forward.1} parent=1 // pred_fallthru
      _
    %v79 = vld [vmem:[#allocation2] sm:$0xff]
    %v80 = vld [vmem:[#allocation4] sm:$0xff]
    %v81 = vld [vmem:[#allocation4 + $0x8] sm:$0xff]
    %v82 = vld [vmem:[%s2] sm:$0x1]
    %v84 = vperm.slane %v82, 0
    %vm86 = vcmask 130048
    %v88 = vsel %vm86, %v79, 0
    %90 = vmatpush.msra.mxu0 0.0
    %91 = vmatpush.msra.mxu0 0.0
    %92 = vmatpush.msra.mxu0 0.0
    %93 = vmatpush.msra.mxu0 0.0
    %94 = vmatpush.msra.mxu0 0.0
    %95 = vmatpush.msra.mxu0 0.0
    %96 = vmatpush.msra.mxu0 0.0
    %97 = vmatpush.msra.mxu0 0.0
    %98 = vmatpush.msra.mxu0 0.0
    %99 = vmatpush.msra.mxu0 0.0
    %100 = vmatpush.msra.mxu0 0.0
    %101 = vmatpush.msra.mxu0 0.0
    %102 = vmatpush.msra.mxu0 0.0
    %103 = vmatpush.msra.mxu0 0.0
    %104 = vmatpush.msra.mxu0 %v81
    %105 = vmatpush.msra.mxu0 %v80
    %106 = vmatmul.f32.gmra.mxu0 %v88
    %v107 = vpop.f32.mrf.mxu0
    %v108 = vadd.f32 %v84, %v107
    %109 = vdwg.mxu0
    %v110 = vmax.f32 %v108, 0.0
    %v111 = vld [vmem:[%s3] sm:$0xff]
    %v112 = vld [vmem:[%s3 + $0x8] sm:$0xff]
    %v113 = vld [vmem:[%s3 + $0x10] sm:$0xff]
    %v114 = vld [vmem:[%s3 + $0x18] sm:$0xff]
    %v115 = vld [vmem:[%s3 + $0x20] sm:$0xff]
    %v116 = vld [vmem:[%s3 + $0x28] sm:$0xff]
    %v117 = vld [vmem:[%s3 + $0x30] sm:$0xff]
    %v118 = vld [vmem:[%s3 + $0x38] sm:$0xff]
    %v119 = vld [vmem:[%s3 + $0x40] sm:$0xff]
    %v120 = vld [vmem:[%s3 + $0x48] sm:$0xff]
    %v121 = vld [vmem:[%s3 + $0x50] sm:$0xff]
    %v122 = vld [vmem:[%s3 + $0x58] sm:$0xff]
    %v123 = vld [vmem:[%s3 + $0x60] sm:$0xff]
    %v124 = vld [vmem:[%s3 + $0x68] sm:$0xff]
    %v125 = vld [vmem:[%s3 + $0x70] sm:$0xff]
    %v126 = vld [vmem:[%s3 + $0x78] sm:$0xff]
    %v127 = vld [vmem:[%s4] sm:$0x1]
    %v129 = vperm.slane %v127, 0
    %131 = vmatpush.msra.mxu0 %v126
    %132 = vmatpush.msra.mxu0 %v125
    %133 = vmatpush.msra.mxu0 %v124
    %134 = vmatpush.msra.mxu0 %v123
    %135 = vmatpush.msra.mxu0 %v122
    %136 = vmatpush.msra.mxu0 %v121
    %137 = vmatpush.msra.mxu0 %v120
    %138 = vmatpush.msra.mxu0 %v119
    %139 = vmatpush.msra.mxu0 %v118
    %140 = vmatpush.msra.mxu0 %v117
    %141 = vmatpush.msra.mxu0 %v116
    %142 = vmatpush.msra.mxu0 %v115
    %143 = vmatpush.msra.mxu0 %v114
    %144 = vmatpush.msra.mxu0 %v113
    %145 = vmatpush.msra.mxu0 %v112
    %146 = vmatpush.msra.mxu0 %v111
    %147 = vmatmul.f32.gmra.mxu0 %v110
    %v148 = vpop.f32.mrf.mxu0
    %v149 = vadd.f32 %v129, %v148
    %150 = vdwg.mxu0
    %v151 = vld [vmem:[#allocation6] sm:$0xff]
    %v152 = vld [vmem:[#allocation6 + $0x8] sm:$0xff]
    %v153 = vld [vmem:[#allocation6 + $0x10] sm:$0xff]
    %v154 = vld [vmem:[#allocation6 + $0x18] sm:$0xff]
    %v155 = vld [vmem:[#allocation6 + $0x20] sm:$0xff]
    %v156 = vld [vmem:[#allocation6 + $0x28] sm:$0xff]
    %v157 = vld [vmem:[#allocation6 + $0x30] sm:$0xff]
    %v158 = vld [vmem:[#allocation6 + $0x38] sm:$0xff]
    %v159 = vld [vmem:[%s6] sm:$0x1]
    %v161 = vperm.slane %v159, 0
    %vm163 = vcmask 523264
    %v165 = vsel %vm163, %v149, 0
    %167 = vmatpush.msra.mxu0 0.0
    %168 = vmatpush.msra.mxu0 0.0
    %169 = vmatpush.msra.mxu0 0.0
    %170 = vmatpush.msra.mxu0 0.0
    %171 = vmatpush.msra.mxu0 0.0
    %172 = vmatpush.msra.mxu0 0.0
    %173 = vmatpush.msra.mxu0 0.0
    %174 = vmatpush.msra.mxu0 0.0
    %175 = vmatpush.msra.mxu0 %v158
    %176 = vmatpush.msra.mxu0 %v157
    %177 = vmatpush.msra.mxu0 %v156
    %178 = vmatpush.msra.mxu0 %v155
    %179 = vmatpush.msra.mxu0 %v154
    %180 = vmatpush.msra.mxu0 %v153
    %181 = vmatpush.msra.mxu0 %v152
    %182 = vmatpush.msra.mxu0 %v151
    %183 = vmatmul.f32.gmra.mxu0 %v165
    %v184 = vpop.f32.mrf.mxu0
    %v185 = vadd.f32 %v161, %v184
    %186 = vdwg.mxu0
    %v187 = vmax.f32 %v185, 0.0
    %v188 = vld [vmem:[%s7] sm:$0xff]
    %v189 = vld [vmem:[%s7 + $0x8] sm:$0xff]
    %v190 = vld [vmem:[%s7 + $0x10] sm:$0xff]
    %v191 = vld [vmem:[%s7 + $0x18] sm:$0xff]
    %v192 = vld [vmem:[%s7 + $0x20] sm:$0xff]
    %v193 = vld [vmem:[%s7 + $0x28] sm:$0xff]
    %v194 = vld [vmem:[%s7 + $0x30] sm:$0xff]
    %v195 = vld [vmem:[%s7 + $0x38] sm:$0xff]
    %v196 = vld [vmem:[%s7 + $0x40] sm:$0xff]
    %v197 = vld [vmem:[%s7 + $0x48] sm:$0xff]
    %v198 = vld [vmem:[%s7 + $0x50] sm:$0xff]
    %v199 = vld [vmem:[%s7 + $0x58] sm:$0xff]
    %v200 = vld [vmem:[%s7 + $0x60] sm:$0xff]
    %v201 = vld [vmem:[%s7 + $0x68] sm:$0xff]
    %v202 = vld [vmem:[%s7 + $0x70] sm:$0xff]
    %v203 = vld [vmem:[%s7 + $0x78] sm:$0xff]
    %v204 = vld [vmem:[%s7 + $0x80] sm:$0xff]
    %v205 = vld [vmem:[%s7 + $0x88] sm:$0xff]
    %v206 = vld [vmem:[%s7 + $0x90] sm:$0xff]
    %v207 = vld [vmem:[%s7 + $0x98] sm:$0xff]
    %v208 = vld [vmem:[%s7 + $0xa0] sm:$0xff]
    %v209 = vld [vmem:[%s7 + $0xa8] sm:$0xff]
    %v210 = vld [vmem:[%s7 + $0xb0] sm:$0xff]
    %v211 = vld [vmem:[%s7 + $0xb8] sm:$0xff]
    %v212 = vld [vmem:[%s8] sm:$0x1]
    %v214 = vperm.slane %v212, 0
    %216 = vmatpush.msra.mxu0 %v203
    %217 = vmatpush.msra.mxu0 %v202
    %218 = vmatpush.msra.mxu0 %v201
    %219 = vmatpush.msra.mxu0 %v200
    %220 = vmatpush.msra.mxu0 %v199
    %221 = vmatpush.msra.mxu0 %v198
    %222 = vmatpush.msra.mxu0 %v197
    %223 = vmatpush.msra.mxu0 %v196
    %224 = vmatpush.msra.mxu0 %v195
    %225 = vmatpush.msra.mxu0 %v194
    %226 = vmatpush.msra.mxu0 %v193
    %227 = vmatpush.msra.mxu0 %v192
    %228 = vmatpush.msra.mxu0 %v191
    %229 = vmatpush.msra.mxu0 %v190
    %230 = vmatpush.msra.mxu0 %v189
    %231 = vmatpush.msra.mxu0 %v188
    %232 = vmatmul.f32.gmra.mxu0 %v187
    %v233 = vpop.f32.mrf.mxu0
    %v234 = vadd.f32 %v214, %v233
    %235 = vdwg.mxu0
    %236 = vmatpush.msra.mxu0 0.0
    %237 = vmatpush.msra.mxu0 0.0
    %238 = vmatpush.msra.mxu0 0.0
    %239 = vmatpush.msra.mxu0 0.0
    %240 = vmatpush.msra.mxu0 0.0
    %241 = vmatpush.msra.mxu0 0.0
    %242 = vmatpush.msra.mxu0 0.0
    %243 = vmatpush.msra.mxu0 0.0
    %244 = vmatpush.msra.mxu0 %v211
    %245 = vmatpush.msra.mxu0 %v210
    %246 = vmatpush.msra.mxu0 %v209
    %247 = vmatpush.msra.mxu0 %v208
    %248 = vmatpush.msra.mxu0 %v207
    %249 = vmatpush.msra.mxu0 %v206
    %250 = vmatpush.msra.mxu0 %v205
    %251 = vmatpush.msra.mxu0 %v204
    %252 = vmatmul.f32.gmra.mxu0 %v165
    %v253 = vpop.f32.mrf.mxu0
    %v254 = vadd.f32 %v234, %v253
    %255 = vdwg.mxu0
    %256 = vst [vmem:[%s9] sm:$0xff] %v254
    %v257 = vlaneseq
    %v258 = vshrl.u32 %v257, 7
    %s259 = smul.u32 0, 8
    %v260 = vstv %s259
    %v261 = vadd.s32 %v258, %v260
    %vm262 = vcmp.lt.s32.totalorder %v261, 8
    %v263 = vsel %vm262, 1, 0
    %v264 = vcvt.s32.f32 %v263
    %v265 = vsub.f32 %v254, %v79
    %v266 = vmul.f32 %v265, %v265
    %v267 = vsel %vm86, %v266, 0.0
    %268 = vadd.xlane.f32.xlu0 %v267
    %v269 = vpop.xlane.xlu0 %268
    %v270 = vmul.f32 %v269, %v264
    %v271 = vmul.f32 %v79, %v79
    %v272 = vsel %vm86, %v271, 0.0
    %273 = vadd.xlane.f32.xlu0 %v272
    %v274 = vpop.xlane.xlu0 %273
    %v275 = vmax.f32 %v274, 1e-24
    %v276 = vrsqrt.pop %v275
    %v277 = vmul.f32 %v276, %v275
    %v278 = vmul.f32 %v277, %v276
    %v279 = vmul.f32 0.5, %v278
    %v280 = vsub.f32 1.5, %v279
    %v281 = vmul.f32 %v276, %v280
    %vm282 = vweird.f32 %v275
    %vm283 = vweird.f32 %v276
    %vm284 = vmor %vm282, %vm283
    %v285 = vsel %vm284, %v276, %v281
    %v286 = vmul.f32 %v254, %v254
    %v287 = vsel %vm86, %v286, 0.0
    %288 = vadd.xlane.f32.xlu0 %v287
    %v289 = vpop.xlane.xlu0 %288
    %v290 = vmax.f32 %v289, 1e-24
    %v291 = vrsqrt.pop %v290
    %v292 = vmul.f32 %v291, %v290
    %v293 = vmul.f32 %v292, %v291
    %v294 = vmul.f32 0.5, %v293
    %v295 = vsub.f32 1.5, %v294
    %v296 = vmul.f32 %v291, %v295
    %vm297 = vweird.f32 %v290
    %vm298 = vweird.f32 %v291
    %vm299 = vmor %vm297, %vm298
    %v300 = vsel %vm299, %v291, %v296
    %v301 = vmul.f32 %v79, %v254
    %v302 = vsel %vm86, %v301, 0.0
    %303 = vadd.xlane.f32.xlu0 %v302
    %v304 = vpop.xlane.xlu0 %303
    %v305 = vmul.f32 %v304, %v285
    %v306 = vmul.f32 %v305, %v300
    %v307 = vand.u32 2147483647, %v306
    %v308 = vmul.f32 %v307, %v264
    %vm309 = vcmask 7168
    %v310 = vsel %vm309, %v270, 0.0
    %311 = vadd.xlane.f32.xlu0 %v310
    %v312 = vpop.xlane.xlu0 %311
    %v313 = vrot.slane %v312, 4
    %v314 = vadd.f32 %v312, %v313
    %v315 = vrot.slane %v314, 2
    %v316 = vadd.f32 %v314, %v315
    %v317 = vrot.slane %v316, 1
    %v318 = vadd.f32 %v316, %v317
    %s319 = vtos %v318
    %v320 = vsel %vm309, %v308, 0.0
    %321 = vadd.xlane.f32.xlu0 %v320
    %v322 = vpop.xlane.xlu0 %321
    %v323 = vrot.slane %v322, 4
    %v324 = vadd.f32 %v322, %v323
    %v325 = vrot.slane %v324, 2
    %v326 = vadd.f32 %v324, %v325
    %v327 = vrot.slane %v326, 1
    %v328 = vadd.f32 %v326, %v327
    %s329 = vtos %v328
    %v330 = vlaneseq
    %v331 = vand.u32 %v330, 127
    %vm332 = vcmp.eq.s32.totalorder %v258, 0
    %vm333 = vcmp.eq.s32.totalorder %v331, 0
    %vm334 = vmand %vm332, %vm333
    %vm335 = vcmp.eq.s32.totalorder %v331, 1
    %vm336 = vmand %vm332, %vm335
    %v337 = vstv %s329
    %v338 = vsel %vm336, %v337, 0.0
    %v339 = vstv %s319
    %v340 = vsel %vm334, %v339, %v338
    %341 = vst [vmem:[%s10] sm:$0xff] %v340
    // Predicated region
    $region50: #{quantum_state_autoencoder_forward.1} parent=1 // pred_check
      _
    $region51: #{quantum_state_autoencoder_forward.1} parent=1 // pred_check_branch
      %343 = sbr.rel (0) target = $region53
    $region52: #{quantum_state_autoencoder_forward.1} parent=1 // pred_region
      _
    $region53: #{quantum_state_autoencoder_forward.1} parent=1 // pred_fallthru
      _
    // Predicated region
    $region54: #{quantum_state_autoencoder_forward.1} parent=1 // pred_check
      _
    $region55: #{quantum_state_autoencoder_forward.1} parent=1 // pred_check_branch
      %345 = sbr.rel (0) target = $region57
    $region56: #{quantum_state_autoencoder_forward.1} parent=1 // pred_region
      _
    $region57: #{quantum_state_autoencoder_forward.1} parent=1 // pred_fallthru
      _
    // Predicated region
    $region58: #{quantum_state_autoencoder_forward.1} parent=1 // pred_check
      _
    $region59: #{quantum_state_autoencoder_forward.1} parent=1 // pred_check_branch
      %347 = sbr.rel (0) target = $region61
    $region60: #{quantum_state_autoencoder_forward.1} parent=1 // pred_region
      _
    $region61: #{quantum_state_autoencoder_forward.1} parent=1 // pred_fallthru
      _
    // Predicated region
    $region62: #{quantum_state_autoencoder_forward.1} parent=1 // pred_check
      _
    $region63: #{quantum_state_autoencoder_forward.1} parent=1 // pred_check_branch
      %349 = sbr.rel (0) target = $region65
    $region64: #{quantum_state_autoencoder_forward.1} parent=1 // pred_region
      _
    $region65: #{quantum_state_autoencoder_forward.1} parent=1 // pred_fallthru
      _
    %350 = vsyncpa [#allocation3], 1
    %351 = vsyncpa [#allocation5], 1

</llo_original>
